<compile_context>
chip_gen: v7x
topology: tpu7x:2x2x1
jax: 0.10.0
libtpu: 0.0.40
codegen_flags: <defaults>
</compile_context>

<pallas_src>
from dataclasses import dataclass
from functools import partial
from typing import Optional
import random

import jax
import jax.numpy as jnp
from jax.experimental import pallas as pl
from jax.experimental.pallas import tpu as pltpu

NOISY_RELATIVE_COORDINATES = "noisy_relative_coordinates"
TIME = "time"
NOISE = "noise"
UNIT_CELL = "unit_cell"
CARTESIAN_FORCES = "cartesian_forces"

HIDDEN = 128            # hidden width (one MXU tile wide)
DEFAULT_TILE_M = 1024   # rows (= batch*n_atoms) per grid step


@dataclass(kw_only=True)
class ScoreNetworkParameters:
    architecture: str
    spatial_dimension: int = 3
    conditional_prob: float = 0.0
    conditional_gamma: float = 2.0


def _round_up(x: int, m: int) -> int:
    return ((x + m - 1) // m) * m


def _concrete_bool(x) -> Optional[bool]:
    """bool() that returns None instead of raising for traced values."""
    try:
        return bool(x)
    except jax.errors.ConcretizationTypeError:
        return None


# --------------------------------------------------------------------------
# Pallas kernel: shared first-layer matmul + force-delta + gamma mix + head.
# --------------------------------------------------------------------------
def _score_mlp_kernel(xs_ref, xf_ref, w1s_ref, w1f_ref, b1_ref, w2_ref, b2_ref,
                      o_ref, *, conditional: bool, gamma: float):
    xs = xs_ref[...]                                   # [TM, F_SH]
    w1s = w1s_ref[...]                                 # [F_SH, H]
    b1 = b1_ref[...]                                   # [1, H]
    w2 = w2_ref[...]                                   # [H, OUT]
    b2 = b2_ref[...]                                   # [1, OUT]

    pre = jnp.dot(xs, w1s, preferred_element_type=jnp.float32) + b1   # [TM, H]

    if conditional:
        delta = jnp.dot(xf_ref[...], w1f_ref[...],
                        preferred_element_type=jnp.float32)           # [TM, H]
        # gamma * f(cond) + (1-gamma) * f(uncond), pushed through the linear
        # second layer so only ONE [TM,H]x[H,OUT] matmul is needed.
        h = gamma * jnp.tanh(pre + delta) + (1.0 - gamma) * jnp.tanh(pre)
    else:
        h = jnp.tanh(pre)

    o_ref[...] = jnp.dot(h, w2, preferred_element_type=jnp.float32) + b2


def _score_mlp_pallas(xs, xf, w1s, w1f, b1, w2, b2, *, conditional: bool,
                      gamma: float, tile_m: int = DEFAULT_TILE_M):
    M, f_sh = xs.shape
    f_force = xf.shape[1]
    hidden = w1s.shape[1]
    out_w = w2.shape[1]

    tm = min(tile_m, _round_up(M, 8))          # never a tile larger than needed
    m_pad = pl.cdiv(M, tm) * tm
    if m_pad != M:
        xs = jnp.pad(xs, ((0, m_pad - M), (0, 0)))
        xf = jnp.pad(xf, ((0, m_pad - M), (0, 0)))

    kernel = partial(_score_mlp_kernel,
                     conditional=bool(conditional), gamma=float(gamma))

    out = pl.pallas_call(
        kernel,
        out_shape=jax.ShapeDtypeStruct((m_pad, out_w), jnp.float32),
        grid=(m_pad // tm,),
        in_specs=[
            pl.BlockSpec((tm, f_sh), lambda i: (i, 0)),        # shared features
            pl.BlockSpec((tm, f_force), lambda i: (i, 0)),     # forces
            pl.BlockSpec((f_sh, hidden), lambda i: (0, 0)),    # W1 (shared rows)
            pl.BlockSpec((f_force, hidden), lambda i: (0, 0)), # W1 (force rows)
            pl.BlockSpec((1, hidden), lambda i: (0, 0)),       # b1
            pl.BlockSpec((hidden, out_w), lambda i: (0, 0)),   # W2
            pl.BlockSpec((1, out_w), lambda i: (0, 0)),        # b2
        ],
        out_specs=pl.BlockSpec((tm, out_w), lambda i: (i, 0)),
        compiler_params=pltpu.CompilerParams(
            dimension_semantics=("parallel",)),
    )(xs, xf, w1s, w1f, b1, w2, b2)
    return out[:M]


# --------------------------------------------------------------------------
# ScoreNetwork: batch checks + forward glue in plain JAX, hot path in Pallas.
# --------------------------------------------------------------------------
class ScoreNetwork:
    def __init__(self, hyper_params: ScoreNetworkParameters):
        self._hyper_params = hyper_params
        self.spatial_dimension = hyper_params.spatial_dimension
        self.conditional_prob = hyper_params.conditional_prob
        self.conditional_gamma = hyper_params.conditional_gamma
        self._host_rng = random.Random(0)   # host-side draw: no device sync

        d = self.spatial_dimension
        self._shared_feature_dim = d + 1 + 1 + d * d   # coords | time | noise | cell
        self._f_sh_pad = _round_up(self._shared_feature_dim, 8)
        self._f_force_pad = _round_up(d, 8)
        self._out_pad = _round_up(d, 8)

        # Deterministic synthetic parameters (padding rows / columns are zero,
        # so padded lanes never influence the real outputs).
        k = jax.random.PRNGKey(42)
        k1, k2, k3, k4, k5 = jax.random.split(k, 5)
        full_feat = self._shared_feature_dim + d
        scale1 = 1.0 / jnp.sqrt(jnp.float32(full_feat))
        scale2 = 1.0 / jnp.sqrt(jnp.float32(HIDDEN))

        w1s = jnp.zeros((self._f_sh_pad, HIDDEN), jnp.float32)
        w1s = w1s.at[: self._shared_feature_dim, :].set(
            scale1 * jax.random.normal(
                k1, (self._shared_feature_dim, HIDDEN), jnp.float32))
        w1f = jnp.zeros((self._f_force_pad, HIDDEN), jnp.float32)
        w1f = w1f.at[:d, :].set(
            scale1 * jax.random.normal(k2, (d, HIDDEN), jnp.float32))
        b1 = 0.01 * jax.random.normal(k3, (1, HIDDEN), jnp.float32)
        w2 = jnp.zeros((HIDDEN, self._out_pad), jnp.float32)
        w2 = w2.at[:, :d].set(
            scale2 * jax.random.normal(k4, (HIDDEN, d), jnp.float32))
        b2 = jnp.zeros((1, self._out_pad), jnp.float32)
        b2 = b2.at[:, :d].set(
            0.01 * jax.random.normal(k5, (1, d), jnp.float32))
        self.w1s, self.w1f, self.b1, self.w2, self.b2 = w1s, w1f, b1, w2, b2

    # ----- batch validation (mirrors the PyTorch _check_batch) ------------
    def _check_batch(self, batch):
        assert NOISY_RELATIVE_COORDINATES in batch
        rc = batch[NOISY_RELATIVE_COORDINATES]
        batch_size = rc.shape[0]
        assert rc.ndim == 3 and rc.shape[2] == self.spatial_dimension
        ok = _concrete_bool(jnp.all(jnp.logical_and(rc >= 0.0, rc < 1.0)))
        assert ok is None or ok, "relative coordinates must be in [0, 1)"
        assert TIME in batch
        times = batch[TIME]
        assert times.shape[0] == batch_size
        assert times.ndim == 2 and times.shape[1] == 1
        ok = _concrete_bool(jnp.all(jnp.logical_and(times >= 0.0, times <= 1.0)))
        assert ok is None or ok, "times must be in [0, 1]"
        assert NOISE in batch
        assert batch[NOISE].shape == times.shape
        assert UNIT_CELL in batch
        uc = batch[UNIT_CELL]
        assert uc.shape[0] == batch_size
        assert uc.ndim == 3 and uc.shape[1] == self.spatial_dimension \
            and uc.shape[2] == self.spatial_dimension
        if self.conditional_prob > 0:
            assert CARTESIAN_FORCES in batch
            cf = batch[CARTESIAN_FORCES]
            assert cf.ndim == 3 and cf.shape[2] == self.spatial_dimension

    # ----- feature construction (glue, plain JAX) --------------------------
    def _build_features(self, batch):
        rc = batch[NOISY_RELATIVE_COORDINATES].astype(jnp.float32)      # [B,N,D]
        B, N, D = rc.shape
        times = batch[TIME].astype(jnp.float32)                         # [B,1]
        noise = batch[NOISE].astype(jnp.float32)                        # [B,1]
        uc = batch[UNIT_CELL].astype(jnp.float32).reshape(B, D * D)     # [B,D*D]

        t_b = jnp.broadcast_to(times[:, None, :], (B, N, 1))
        n_b = jnp.broadcast_to(noise[:, None, :], (B, N, 1))
        uc_b = jnp.broadcast_to(uc[:, None, :], (B, N, D * D))
        xs = jnp.concatenate([rc, t_b, n_b, uc_b], axis=-1)
        xs = xs.reshape(B * N, self._shared_feature_dim)
        xs = jnp.pad(xs, ((0, 0), (0, self._f_sh_pad - self._shared_feature_dim)))

        if CARTESIAN_FORCES in batch:
            xf = batch[CARTESIAN_FORCES].astype(jnp.float32).reshape(B * N, D)
        else:
            xf = jnp.zeros((B * N, D), jnp.float32)
        xf = jnp.pad(xf, ((0, 0), (0, self._f_force_pad - D)))
        return xs, xf

    # ----- forward ---------------------------------------------------------
    def forward(self, batch, conditional: Optional[bool] = None,
                check_batch: bool = True):
        if check_batch:
            self._check_batch(batch)
        if conditional is None:
            conditional = self._host_rng.random() < self.conditional_prob

        rc = batch[NOISY_RELATIVE_COORDINATES]
        B, N, D = rc.shape
        xs, xf = self._build_features(batch)
        out = _score_mlp_pallas(
            xs, xf, self.w1s, self.w1f, self.b1, self.w2, self.b2,
            conditional=bool(conditional), gamma=self.conditional_gamma)
        return out[:, :D].reshape(B, N, D)

    # pure-JAX reference mirroring the PyTorch combination formula
    def _forward_ref(self, batch, conditional: bool):
        rc = batch[NOISY_RELATIVE_COORDINATES]
        B, N, D = rc.shape
        xs, xf = self._build_features(batch)
        pre = xs @ self.w1s + self.b1
        if conditional:
            out_c = jnp.tanh(pre + xf @ self.w1f) @ self.w2 + self.b2
            out_u = jnp.tanh(pre) @ self.w2 + self.b2
            g = self.conditional_gamma
            out = g * out_c + (1.0 - g) * out_u
        else:
            out = jnp.tanh(pre) @ self.w2 + self.b2
        return out[:, :D].reshape(B, N, D)


if __name__ == "__main__":
    params = ScoreNetworkParameters(architecture="mlp",
                                    spatial_dimension=3,
                                    conditional_prob=0.5,
                                    conditional_gamma=2.0)
    net = ScoreNetwork(params)

    def make_batch(key, B, N, D):
        k1, k2, k3, k4, k5 = jax.random.split(key, 5)
        return {
            NOISY_RELATIVE_COORDINATES: jax.random.uniform(
                k1, (B, N, D), jnp.float32, minval=0.0, maxval=0.999),
            TIME: jax.random.uniform(k2, (B, 1), jnp.float32),
            NOISE: jax.random.uniform(k3, (B, 1), jnp.float32),
            UNIT_CELL: jnp.eye(D, dtype=jnp.float32)[None] * (
                1.0 + 0.1 * jax.random.uniform(k4, (B, 1, 1), jnp.float32)),
            CARTESIAN_FORCES: jax.random.normal(k5, (B, N, D), jnp.float32),
        }

    key = jax.random.PRNGKey(0)
    k_small, k_big = jax.random.split(key)

    # --- small shape (single tile) ---
    B, N, D = 2, 8, 3
    batch = make_batch(k_small, B, N, D)
    out_cond = net.forward(batch, conditional=True)
    out_uncond = net.forward(batch, conditional=False)
    jax.block_until_ready(out_cond)
    jax.block_until_ready(out_uncond)
    ref_cond = net._forward_ref(batch, conditional=True)
    ref_uncond = net._forward_ref(batch, conditional=False)
    assert out_cond.shape == (B, N, D)
    assert out_uncond.shape == (B, N, D)
    assert jnp.allclose(out_cond, ref_cond, atol=1e-4, rtol=1e-4)
    assert jnp.allclose(out_uncond, ref_uncond, atol=1e-4, rtol=1e-4)

    # --- larger shape (exercises multi-tile grid + partial-tile padding) ---
    B2, N2 = 3, 400   # M = 1200 -> 2 tiles of 1024 rows (last one padded)
    batch2 = make_batch(k_big, B2, N2, D)
    out2 = net.forward(batch2, conditional=True)
    jax.block_until_ready(out2)
    ref2 = net._forward_ref(batch2, conditional=True)
    assert out2.shape == (B2, N2, D)
    assert jnp.allclose(out2, ref2, atol=1e-4, rtol=1e-4)

    print("KERNEL_OK")
</pallas_src>

<mosaic_0001>
module attributes {stable_mosaic.version = 11 : i64} {
  func.func @_score_mlp_kernel(%arg0: i32, %arg1: memref<16x16xf32, #tpu.memory_space<vmem>>, %arg2: memref<16x8xf32, #tpu.memory_space<vmem>>, %arg3: memref<16x128xf32, #tpu.memory_space<vmem>>, %arg4: memref<8x128xf32, #tpu.memory_space<vmem>>, %arg5: memref<1x128xf32, #tpu.memory_space<vmem>>, %arg6: memref<128x8xf32, #tpu.memory_space<vmem>>, %arg7: memref<1x8xf32, #tpu.memory_space<vmem>>, %arg8: memref<16x8xf32, #tpu.memory_space<vmem>>) attributes {dimension_semantics = [#tpu.dimension_semantics<parallel>], iteration_bounds = array<i64: 1>, scalar_prefetch = 0 : i64, scratch_operands = 0 : i64, tpu.core_type = #tpu.core_type<tc>, window_params = [{transform_indices = @transform_0, window_bounds = array<i64: 16, 16>}, {transform_indices = @transform_1, window_bounds = array<i64: 16, 8>}, {pipeline_mode = #tpu.pipeline_mode<synchronous>, transform_indices = @transform_2, window_bounds = array<i64: 16, 128>}, {pipeline_mode = #tpu.pipeline_mode<synchronous>, transform_indices = @transform_3, window_bounds = array<i64: 8, 128>}, {pipeline_mode = #tpu.pipeline_mode<synchronous>, transform_indices = @transform_4, window_bounds = array<i64: 1, 128>}, {pipeline_mode = #tpu.pipeline_mode<synchronous>, transform_indices = @transform_5, window_bounds = array<i64: 128, 8>}, {pipeline_mode = #tpu.pipeline_mode<synchronous>, transform_indices = @transform_6, window_bounds = array<i64: 1, 8>}, {transform_indices = @transform_7, window_bounds = array<i64: 16, 8>}]} {
    %c0 = arith.constant 0 : index
    %c0_0 = arith.constant 0 : index
    %0 = vector.load %arg1[%c0, %c0_0] : memref<16x16xf32, #tpu.memory_space<vmem>>, vector<16x16xf32>
    %c0_1 = arith.constant 0 : index
    %c0_2 = arith.constant 0 : index
    %1 = vector.load %arg3[%c0_1, %c0_2] : memref<16x128xf32, #tpu.memory_space<vmem>>, vector<16x128xf32>
    %c0_3 = arith.constant 0 : index
    %c0_4 = arith.constant 0 : index
    %2 = vector.load %arg5[%c0_3, %c0_4] : memref<1x128xf32, #tpu.memory_space<vmem>>, vector<1x128xf32>
    %c0_5 = arith.constant 0 : index
    %c0_6 = arith.constant 0 : index
    %3 = vector.load %arg6[%c0_5, %c0_6] : memref<128x8xf32, #tpu.memory_space<vmem>>, vector<128x8xf32>
    %c0_7 = arith.constant 0 : index
    %c0_8 = arith.constant 0 : index
    %4 = vector.load %arg7[%c0_7, %c0_8] : memref<1x8xf32, #tpu.memory_space<vmem>>, vector<1x8xf32>
    %cst = arith.constant dense<0.000000e+00> : vector<16x128xf32>
    %5 = tpu.matmul %0, %1, %cst {dimension_numbers = #tpu.dot_dimension_numbers<[1], [0], [0], [1], [0, 0, 1, 1], [], []>} : vector<16x16xf32>, vector<16x128xf32>, vector<16x128xf32> -> vector<16x128xf32>
    %6 = vector.broadcast %2 : vector<1x128xf32> to vector<16x128xf32>
    %7 = arith.addf %5, %6 : vector<16x128xf32>
    %c0_9 = arith.constant 0 : index
    %c0_10 = arith.constant 0 : index
    %8 = vector.load %arg2[%c0_9, %c0_10] : memref<16x8xf32, #tpu.memory_space<vmem>>, vector<16x8xf32>
    %c0_11 = arith.constant 0 : index
    %c0_12 = arith.constant 0 : index
    %9 = vector.load %arg4[%c0_11, %c0_12] : memref<8x128xf32, #tpu.memory_space<vmem>>, vector<8x128xf32>
    %cst_13 = arith.constant dense<0.000000e+00> : vector<16x128xf32>
    %10 = tpu.matmul %8, %9, %cst_13 {dimension_numbers = #tpu.dot_dimension_numbers<[1], [0], [0], [1], [0, 0, 1, 1], [], []>} : vector<16x8xf32>, vector<8x128xf32>, vector<16x128xf32> -> vector<16x128xf32>
    %11 = arith.addf %7, %10 : vector<16x128xf32>
    %12 = math.tanh %11 : vector<16x128xf32>
    %cst_14 = arith.constant 2.000000e+00 : f32
    %13 = vector.broadcast %cst_14 : f32 to vector<16x128xf32>
    %14 = arith.mulf %13, %12 : vector<16x128xf32>
    %15 = math.tanh %7 : vector<16x128xf32>
    %cst_15 = arith.constant -1.000000e+00 : f32
    %16 = vector.broadcast %cst_15 : f32 to vector<16x128xf32>
    %17 = arith.mulf %16, %15 : vector<16x128xf32>
    %18 = arith.addf %14, %17 : vector<16x128xf32>
    %cst_16 = arith.constant dense<0.000000e+00> : vector<16x8xf32>
    %19 = tpu.matmul %18, %3, %cst_16 {dimension_numbers = #tpu.dot_dimension_numbers<[1], [0], [0], [1], [0, 0, 1, 1], [], []>} : vector<16x128xf32>, vector<128x8xf32>, vector<16x8xf32> -> vector<16x8xf32>
    %20 = vector.broadcast %4 : vector<1x8xf32> to vector<16x8xf32>
    %21 = arith.addf %19, %20 : vector<16x8xf32>
    %c0_17 = arith.constant 0 : index
    %c0_18 = arith.constant 0 : index
    %22 = vector.load %arg8[%c0_17, %c0_18] : memref<16x8xf32, #tpu.memory_space<vmem>>, vector<16x8xf32>
    tpu.vector_store %arg8[%c0_17, %c0_18], %21 {strides = array<i32>} : memref<16x8xf32, #tpu.memory_space<vmem>>, vector<16x8xf32>,
    return
  }
  func.func @transform_0(%arg0: i32) -> (i32, i32) {
    %c0_i32 = arith.constant 0 : i32
    %c0_i32_0 = arith.constant 0 : i32
    return %arg0, %c0_i32 : i32, i32
  }
  func.func @transform_1(%arg0: i32) -> (i32, i32) {
    %c0_i32 = arith.constant 0 : i32
    %c0_i32_0 = arith.constant 0 : i32
    return %arg0, %c0_i32 : i32, i32
  }
  func.func @transform_2(%arg0: i32) -> (i32, i32) {
    %c0_i32 = arith.constant 0 : i32
    %c0_i32_0 = arith.constant 0 : i32
    %c0_i32_1 = arith.constant 0 : i32
    return %c0_i32, %c0_i32_0 : i32, i32
  }
  func.func @transform_3(%arg0: i32) -> (i32, i32) {
    %c0_i32 = arith.constant 0 : i32
    %c0_i32_0 = arith.constant 0 : i32
    %c0_i32_1 = arith.constant 0 : i32
    return %c0_i32, %c0_i32_0 : i32, i32
  }
  func.func @transform_4(%arg0: i32) -> (i32, i32) {
    %c0_i32 = arith.constant 0 : i32
    %c0_i32_0 = arith.constant 0 : i32
    %c0_i32_1 = arith.constant 0 : i32
    return %c0_i32, %c0_i32_0 : i32, i32
  }
  func.func @transform_5(%arg0: i32) -> (i32, i32) {
    %c0_i32 = arith.constant 0 : i32
    %c0_i32_0 = arith.constant 0 : i32
    %c0_i32_1 = arith.constant 0 : i32
    return %c0_i32, %c0_i32_0 : i32, i32
  }
  func.func @transform_6(%arg0: i32) -> (i32, i32) {
    %c0_i32 = arith.constant 0 : i32
    %c0_i32_0 = arith.constant 0 : i32
    %c0_i32_1 = arith.constant 0 : i32
    return %c0_i32, %c0_i32_0 : i32, i32
  }
  func.func @transform_7(%arg0: i32) -> (i32, i32) {
    %c0_i32 = arith.constant 0 : i32
    %c0_i32_0 = arith.constant 0 : i32
    return %arg0, %c0_i32 : i32, i32
  }
}

</mosaic_0001>

<llo_original>
// kernel: tpu_custom_call.1
$region0: #{tpu_custom_call.1}
  #allocation0 [shape = 'u32[]', space=smem, size = 0x4, offset = 0x4, fixed_abs, tag = 'smem constant byte address 0x4 - core index']
  #allocation1 [shape = 'u32[144,128]{1,0:T(1,128)}', space=vmem, size = 0x12000, scoped, tag = 'internal scratch']
  %s0 = inlined_call_operand.vmem [shape: f32[16,16], index: 0, kind: input, shape index: {}]
  %s1 = inlined_call_operand.vmem [shape: f32[16,8], index: 1, kind: input, shape index: {}]
  %s2 = inlined_call_operand.vmem [shape: f32[16,128], index: 2, kind: input, shape index: {}]
  %s3 = inlined_call_operand.vmem [shape: f32[8,128], index: 3, kind: input, shape index: {}]
  %s4 = inlined_call_operand.vmem [shape: f32[1,128], index: 4, kind: input, shape index: {}]
  %s5 = inlined_call_operand.vmem [shape: f32[128,8], index: 5, kind: input, shape index: {}]
  %s6 = inlined_call_operand.vmem [shape: f32[1,8], index: 6, kind: input, shape index: {}]
  %s7 = inlined_call_operand.vmem [shape: f32[16,8], index: 7, kind: output, shape index: {}]
  %s8 = sld [smem:[#allocation0]]
  $region38: #{tpu_custom_call.1} parent=0
    _
  %s10 = ssub.s32 1, %s8
  %s11 = scalar_select 0, %s10, %s8
  // Predicated region
  $region2: #{tpu_custom_call.1} parent=0 // pred_check
    _
  $region3: #{tpu_custom_call.1} parent=0 // pred_check_branch
    %13 = sbr.rel (0) target = $region5
  $region4: #{tpu_custom_call.1} parent=0 // pred_region
    _
  $region5: #{tpu_custom_call.1} parent=0 // pred_fallthru
    _
  // Predicated region
  $region6: #{tpu_custom_call.1} parent=0 // pred_check
    _
  $region7: #{tpu_custom_call.1} parent=0 // pred_check_branch
    %15 = sbr.rel (0) target = $region9
  $region8: #{tpu_custom_call.1} parent=0 // pred_region
    _
  $region9: #{tpu_custom_call.1} parent=0 // pred_fallthru
    _
  // Predicated region
  $region10: #{tpu_custom_call.1} parent=0 // pred_check
    _
  $region11: #{tpu_custom_call.1} parent=0 // pred_check_branch
    %17 = sbr.rel (0) target = $region13
  $region12: #{tpu_custom_call.1} parent=0 // pred_region
    _
  $region13: #{tpu_custom_call.1} parent=0 // pred_fallthru
    _
  // Predicated region
  $region14: #{tpu_custom_call.1} parent=0 // pred_check
    _
  $region15: #{tpu_custom_call.1} parent=0 // pred_check_branch
    %19 = sbr.rel (0) target = $region17
  $region16: #{tpu_custom_call.1} parent=0 // pred_region
    _
  $region17: #{tpu_custom_call.1} parent=0 // pred_fallthru
    _
  // Predicated region
  $region18: #{tpu_custom_call.1} parent=0 // pred_check
    _
  $region19: #{tpu_custom_call.1} parent=0 // pred_check_branch
    %21 = sbr.rel (0) target = $region21
  $region20: #{tpu_custom_call.1} parent=0 // pred_region
    _
  $region21: #{tpu_custom_call.1} parent=0 // pred_fallthru
    _
  // Predicated region
  $region22: #{tpu_custom_call.1} parent=0 // pred_check
    _
  $region23: #{tpu_custom_call.1} parent=0 // pred_check_branch
    %23 = sbr.rel (0) target = $region25
  $region24: #{tpu_custom_call.1} parent=0 // pred_region
    _
  $region25: #{tpu_custom_call.1} parent=0 // pred_fallthru
    _
  // Predicated region
  $region26: #{tpu_custom_call.1} parent=0 // pred_check
    _
  $region27: #{tpu_custom_call.1} parent=0 // pred_check_branch
    %25 = sbr.rel (0) target = $region29
  $region28: #{tpu_custom_call.1} parent=0 // pred_region
    _
  $region29: #{tpu_custom_call.1} parent=0 // pred_fallthru
    _
  %v26 = vld [vmem:[%s0] sm:$0xff]
  %v27 = vld [vmem:[%s0 + $0x8] sm:$0xff]
  %v28 = vld [vmem:[%s2] sm:$0xff]
  %v29 = vld [vmem:[%s2 + $0x8] sm:$0xff]
  %v30 = vld [vmem:[%s4] sm:$0x1]
  %v31 = vld [vmem:[%s5] sm:$0xff]
  %v32 = vld [vmem:[%s5 + $0x8] sm:$0xff]
  %v33 = vld [vmem:[%s5 + $0x10] sm:$0xff]
  %v34 = vld [vmem:[%s5 + $0x18] sm:$0xff]
  %v35 = vld [vmem:[%s5 + $0x20] sm:$0xff]
  %v36 = vld [vmem:[%s5 + $0x28] sm:$0xff]
  %v37 = vld [vmem:[%s5 + $0x30] sm:$0xff]
  %v38 = vld [vmem:[%s5 + $0x38] sm:$0xff]
  %v39 = vld [vmem:[%s5 + $0x40] sm:$0xff]
  %v40 = vld [vmem:[%s5 + $0x48] sm:$0xff]
  %v41 = vld [vmem:[%s5 + $0x50] sm:$0xff]
  %v42 = vld [vmem:[%s5 + $0x58] sm:$0xff]
  %v43 = vld [vmem:[%s5 + $0x60] sm:$0xff]
  %v44 = vld [vmem:[%s5 + $0x68] sm:$0xff]
  %v45 = vld [vmem:[%s5 + $0x70] sm:$0xff]
  %v46 = vld [vmem:[%s5 + $0x78] sm:$0xff]
  %v47 = vld [vmem:[%s6] sm:$0x1]
  %v49 = vlaneseq
  %v50 = vshrl.u32 %v49, 7
  %v51 = vsub.s32 0, %v50
  %v52 = vrot.slane %v30, %v51
  %vm54 = vcmask 130048
  %v56 = vsel %vm54, %v26, 0
  %v59 = vsel %vm54, %v27, 0
  %61 = vmatprep.subr.mxu0 0.0
  %62 = vmatpush1.msra.mxu0 %v28
  %63 = vmatprep.subr.mxu0 0.0
  %64 = vmatpush1.msra.mxu0 %v29
  %65 = vmatprep.subr.mxu0 0.0
  %66 = vmatpush1.msra.mxu0 0.0
  %67 = vmatprep.subr.mxu0 0.0
  %68 = vmatpush1.msra.mxu0 0.0
  %69 = vmatprep.subr.mxu0 0.0
  %70 = vmatpush1.msra.mxu0 0.0
  %71 = vmatprep.subr.mxu0 0.0
  %72 = vmatpush1.msra.mxu0 0.0
  %73 = vmatprep.subr.mxu0 0.0
  %74 = vmatpush1.msra.mxu0 0.0
  %75 = vmatprep.subr.mxu0 0.0
  %76 = vmatpush1.msra.mxu0 0.0
  %77 = vmatprep.subr.mxu0 0.0
  %78 = vmatpush1.msra.mxu0 0.0
  %79 = vmatprep.subr.mxu0 0.0
  %80 = vmatpush1.msra.mxu0 0.0
  %81 = vmatprep.subr.mxu0 0.0
  %82 = vmatpush1.msra.mxu0 0.0
  %83 = vmatprep.subr.mxu0 0.0
  %84 = vmatpush1.msra.mxu0 0.0
  %85 = vmatprep.subr.mxu0 0.0
  %86 = vmatpush1.msra.mxu0 0.0
  %87 = vmatprep.subr.mxu0 0.0
  %88 = vmatpush1.msra.mxu0 0.0
  %89 = vmatprep.subr.mxu0 0.0
  %90 = vmatpush1.msra.mxu0 0.0
  %91 = vmatprep.subr.mxu0 0.0
  %92 = vmatpush1.msra.mxu0 0.0
  %93 = vmatprep.subr.mxu0 0.0
  %94 = vmatpush1.msra.mxu0 0.0
  %95 = vmatprep.subr.mxu0 0.0
  %96 = vmatpush1.msra.mxu0 0.0
  %97 = vmatprep.subr.mxu0 0.0
  %98 = vmatpush1.msra.mxu0 0.0
  %99 = vmatprep.subr.mxu0 0.0
  %100 = vmatpush1.msra.mxu0 0.0
  %101 = vmatprep.subr.mxu0 0.0
  %102 = vmatpush1.msra.mxu0 0.0
  %103 = vmatprep.subr.mxu0 0.0
  %104 = vmatpush1.msra.mxu0 0.0
  %105 = vmatprep.subr.mxu0 0.0
  %106 = vmatpush1.msra.mxu0 0.0
  %107 = vmatprep.subr.mxu0 0.0
  %108 = vmatpush1.msra.mxu0 0.0
  %109 = vmatprep.subr.mxu0 0.0
  %110 = vmatpush1.msra.mxu0 0.0
  %111 = vmatprep.subr.mxu0 0.0
  %112 = vmatpush1.msra.mxu0 0.0
  %113 = vmatprep.subr.mxu0 0.0
  %114 = vmatpush1.msra.mxu0 0.0
  %115 = vmatprep.subr.mxu0 0.0
  %116 = vmatpush1.msra.mxu0 0.0
  %117 = vmatprep.subr.mxu0 0.0
  %118 = vmatpush1.msra.mxu0 0.0
  %119 = vmatprep.subr.mxu0 0.0
  %120 = vmatpush1.msra.mxu0 0.0
  %121 = vmatprep.subr.mxu0 0.0
  %122 = vmatpush1.msra.mxu0 0.0
  %123 = vmatprep.subr.mxu0 0.0
  %124 = vmatpush1.msra.mxu0 0.0
  %125 = vmatprep.mubr.f32.mxu0 0.0
  %126 = vmatmul.mubr.f32.gmra.mrb[0].mxu0 %v56
  %v127 = vpop.f32.mrb[0].mxu0
  %v128 = vadd.f32 %v52, %v127
  %v129 = vpop.f32.mrb[0].mxu0
  %130 = vmatprep.mubr.f32.mxu0 0.0
  %131 = vmatmul.mubr.f32.gmra.mrb[0].mxu0 %v59
  %v132 = vpop.f32.mrb[0].mxu0
  %v133 = vadd.f32 %v52, %v132
  %v134 = vpop.f32.mrb[0].mxu0
  %135 = vdwg.mxu0
  %v136 = vld [vmem:[%s1] sm:$0xff]
  %v137 = vld [vmem:[%s1 + $0x8] sm:$0xff]
  %v138 = vld [vmem:[%s3] sm:$0xff]
  %vm139 = vcmask 64512
  %v141 = vsel %vm139, %v136, 0
  %v144 = vsel %vm139, %v137, 0
  %146 = vmatprep.subr.mxu0 0.0
  %147 = vmatpush1.msra.mxu0 %v138
  %148 = vmatprep.subr.mxu0 0.0
  %149 = vmatpush1.msra.mxu0 0.0
  %150 = vmatprep.subr.mxu0 0.0
  %151 = vmatpush1.msra.mxu0 0.0
  %152 = vmatprep.subr.mxu0 0.0
  %153 = vmatpush1.msra.mxu0 0.0
  %154 = vmatprep.subr.mxu0 0.0
  %155 = vmatpush1.msra.mxu0 0.0
  %156 = vmatprep.subr.mxu0 0.0
  %157 = vmatpush1.msra.mxu0 0.0
  %158 = vmatprep.subr.mxu0 0.0
  %159 = vmatpush1.msra.mxu0 0.0
  %160 = vmatprep.subr.mxu0 0.0
  %161 = vmatpush1.msra.mxu0 0.0
  %162 = vmatprep.subr.mxu0 0.0
  %163 = vmatpush1.msra.mxu0 0.0
  %164 = vmatprep.subr.mxu0 0.0
  %165 = vmatpush1.msra.mxu0 0.0
  %166 = vmatprep.subr.mxu0 0.0
  %167 = vmatpush1.msra.mxu0 0.0
  %168 = vmatprep.subr.mxu0 0.0
  %169 = vmatpush1.msra.mxu0 0.0
  %170 = vmatprep.subr.mxu0 0.0
  %171 = vmatpush1.msra.mxu0 0.0
  %172 = vmatprep.subr.mxu0 0.0
  %173 = vmatpush1.msra.mxu0 0.0
  %174 = vmatprep.subr.mxu0 0.0
  %175 = vmatpush1.msra.mxu0 0.0
  %176 = vmatprep.subr.mxu0 0.0
  %177 = vmatpush1.msra.mxu0 0.0
  %178 = vmatprep.subr.mxu0 0.0
  %179 = vmatpush1.msra.mxu0 0.0
  %180 = vmatprep.subr.mxu0 0.0
  %181 = vmatpush1.msra.mxu0 0.0
  %182 = vmatprep.subr.mxu0 0.0
  %183 = vmatpush1.msra.mxu0 0.0
  %184 = vmatprep.subr.mxu0 0.0
  %185 = vmatpush1.msra.mxu0 0.0
  %186 = vmatprep.subr.mxu0 0.0
  %187 = vmatpush1.msra.mxu0 0.0
  %188 = vmatprep.subr.mxu0 0.0
  %189 = vmatpush1.msra.mxu0 0.0
  %190 = vmatprep.subr.mxu0 0.0
  %191 = vmatpush1.msra.mxu0 0.0
  %192 = vmatprep.subr.mxu0 0.0
  %193 = vmatpush1.msra.mxu0 0.0
  %194 = vmatprep.subr.mxu0 0.0
  %195 = vmatpush1.msra.mxu0 0.0
  %196 = vmatprep.subr.mxu0 0.0
  %197 = vmatpush1.msra.mxu0 0.0
  %198 = vmatprep.subr.mxu0 0.0
  %199 = vmatpush1.msra.mxu0 0.0
  %200 = vmatprep.subr.mxu0 0.0
  %201 = vmatpush1.msra.mxu0 0.0
  %202 = vmatprep.subr.mxu0 0.0
  %203 = vmatpush1.msra.mxu0 0.0
  %204 = vmatprep.subr.mxu0 0.0
  %205 = vmatpush1.msra.mxu0 0.0
  %206 = vmatprep.subr.mxu0 0.0
  %207 = vmatpush1.msra.mxu0 0.0
  %208 = vmatprep.subr.mxu0 0.0
  %209 = vmatpush1.msra.mxu0 0.0
  %210 = vmatprep.mubr.f32.mxu0 0.0
  %211 = vmatmul.mubr.f32.gmra.mrb[0].mxu0 %v141
  %v212 = vpop.f32.mrb[0].mxu0
  %v213 = vadd.f32 0.0, %v212
  %v214 = vpop.f32.mrb[0].mxu0
  %215 = vmatprep.mubr.f32.mxu0 0.0
  %216 = vmatmul.mubr.f32.gmra.mrb[0].mxu0 %v144
  %v217 = vpop.f32.mrb[0].mxu0
  %v218 = vadd.f32 0.0, %v217
  %v219 = vpop.f32.mrb[0].mxu0
  %220 = vdwg.mxu0
  %v221 = vadd.f32 %v128, %v213
  %v222 = vadd.f32 %v133, %v218
  %v223 = vtanh.pop %v221
  %v224 = vtanh.pop %v222
  %v225 = vmul.f32 %v223, 2.0
  %v226 = vmul.f32 %v224, 2.0
  %v227 = vtanh.pop %v128
  %v228 = vtanh.pop %v133
  %v229 = vmul.f32 %v227, -1.0
  %v230 = vmul.f32 %v228, -1.0
  %v231 = vadd.f32 %v225, %v229
  %v232 = vadd.f32 %v226, %v230
  %v234 = vlaneseq
  %v235 = vshrl.u32 %v234, 7
  %v236 = vsub.s32 0, %v235
  %v237 = vrot.slane %v47, %v236
  %239 = vmatprep.subr.mxu0 0.0
  %240 = vmatpush1.msra.mxu0 %v31
  %241 = vmatprep.subr.mxu0 0.0
  %242 = vmatpush1.msra.mxu0 %v32
  %243 = vmatprep.subr.mxu0 0.0
  %244 = vmatpush1.msra.mxu0 %v33
  %245 = vmatprep.subr.mxu0 0.0
  %246 = vmatpush1.msra.mxu0 %v34
  %247 = vmatprep.subr.mxu0 0.0
  %248 = vmatpush1.msra.mxu0 %v35
  %249 = vmatprep.subr.mxu0 0.0
  %250 = vmatpush1.msra.mxu0 %v36
  %251 = vmatprep.subr.mxu0 0.0
  %252 = vmatpush1.msra.mxu0 %v37
  %253 = vmatprep.subr.mxu0 0.0
  %254 = vmatpush1.msra.mxu0 %v38
  %255 = vmatprep.subr.mxu0 0.0
  %256 = vmatpush1.msra.mxu0 %v39
  %257 = vmatprep.subr.mxu0 0.0
  %258 = vmatpush1.msra.mxu0 %v40
  %259 = vmatprep.subr.mxu0 0.0
  %260 = vmatpush1.msra.mxu0 %v41
  %261 = vmatprep.subr.mxu0 0.0
  %262 = vmatpush1.msra.mxu0 %v42
  %263 = vmatprep.subr.mxu0 0.0
  %264 = vmatpush1.msra.mxu0 %v43
  %265 = vmatprep.subr.mxu0 0.0
  %266 = vmatpush1.msra.mxu0 %v44
  %267 = vmatprep.subr.mxu0 0.0
  %268 = vmatpush1.msra.mxu0 %v45
  %269 = vmatprep.subr.mxu0 0.0
  %270 = vmatpush1.msra.mxu0 %v46
  %271 = vmatprep.subr.mxu0 0.0
  %272 = vmatpush1.msra.mxu0 0.0
  %273 = vmatprep.subr.mxu0 0.0
  %274 = vmatpush1.msra.mxu0 0.0
  %275 = vmatprep.subr.mxu0 0.0
  %276 = vmatpush1.msra.mxu0 0.0
  %277 = vmatprep.subr.mxu0 0.0
  %278 = vmatpush1.msra.mxu0 0.0
  %279 = vmatprep.subr.mxu0 0.0
  %280 = vmatpush1.msra.mxu0 0.0
  %281 = vmatprep.subr.mxu0 0.0
  %282 = vmatpush1.msra.mxu0 0.0
  %283 = vmatprep.subr.mxu0 0.0
  %284 = vmatpush1.msra.mxu0 0.0
  %285 = vmatprep.subr.mxu0 0.0
  %286 = vmatpush1.msra.mxu0 0.0
  %287 = vmatprep.subr.mxu0 0.0
  %288 = vmatpush1.msra.mxu0 0.0
  %289 = vmatprep.subr.mxu0 0.0
  %290 = vmatpush1.msra.mxu0 0.0
  %291 = vmatprep.subr.mxu0 0.0
  %292 = vmatpush1.msra.mxu0 0.0
  %293 = vmatprep.subr.mxu0 0.0
  %294 = vmatpush1.msra.mxu0 0.0
  %295 = vmatprep.subr.mxu0 0.0
  %296 = vmatpush1.msra.mxu0 0.0
  %297 = vmatprep.subr.mxu0 0.0
  %298 = vmatpush1.msra.mxu0 0.0
  %299 = vmatprep.subr.mxu0 0.0
  %300 = vmatpush1.msra.mxu0 0.0
  %301 = vmatprep.subr.mxu0 0.0
  %302 = vmatpush1.msra.mxu0 0.0
  %303 = vmatprep.mubr.f32.mxu0 0.0
  %304 = vmatmul.mubr.f32.gmra.mrb[0].mxu0 %v231
  %v305 = vpop.f32.mrb[0].mxu0
  %v306 = vadd.f32 %v237, %v305
  %v307 = vpop.f32.mrb[0].mxu0
  %308 = vmatprep.mubr.f32.mxu0 0.0
  %309 = vmatmul.mubr.f32.gmra.mrb[0].mxu0 %v232
  %v310 = vpop.f32.mrb[0].mxu0
  %v311 = vadd.f32 %v237, %v310
  %v312 = vpop.f32.mrb[0].mxu0
  %313 = vdwg.mxu0
  %314 = vst.msk [vmem:[%s7] sm:$0xff] %vm139, %v306
  %315 = vst.msk [vmem:[%s7 + $0x8] sm:$0xff] %vm139, %v311
  // Predicated region
  $region30: #{tpu_custom_call.1} parent=0 // pred_check
    _
  $region31: #{tpu_custom_call.1} parent=0 // pred_check_branch
    %317 = sbr.rel (0) target = $region33
  $region32: #{tpu_custom_call.1} parent=0 // pred_region
    _
  $region33: #{tpu_custom_call.1} parent=0 // pred_fallthru
    _
  // Predicated region
  $region34: #{tpu_custom_call.1} parent=0 // pred_check
    _
  $region35: #{tpu_custom_call.1} parent=0 // pred_check_branch
    %319 = sbr.rel (0) target = $region37
  $region36: #{tpu_custom_call.1} parent=0 // pred_region
    _
  $region37: #{tpu_custom_call.1} parent=0 // pred_fallthru
    _

</llo_original>
